<compile_context>
chip_gen: v5e
topology: v5e:2x2
jax: 0.10.0
libtpu: 0.0.40
codegen_flags: <defaults>
</compile_context>

<pallas_src>
import jax
import jax.numpy as jnp
from jax.experimental import pallas as pl
from jax.experimental.pallas import tpu as pltpu


def _dummy_kernel(wb_ref, out_ref):
    # wb_ref : (2, C)  row 0 = W^T, row 1 = b
    # out_ref: (TB, C)
    # linear(ones) == broadcast(w + b); dropout(eval) and last_layer are identity.
    # TODO(synk): C=10 leaves the lane dim sparse (masked vst); if num_classes
    # grows, keep it a multiple of 128 for lane-dense stores.
    row = wb_ref[0:1, :] + wb_ref[1:2, :]                 # VPU add, one vreg
    out_ref[...] = jnp.broadcast_to(row, out_ref.shape)   # sublane broadcast


def _choose_tb(batch: int) -> int:
    # (TB, C) f32 block pads lanes to 128 -> TB*128*4 B; double-buffered TB=1024
    # is ~1 MiB, comfortably inside even v7x's scoped VMEM.
    if batch <= 1024:
        return batch          # block == full dim: always layout-legal
    return 1024               # multiple of 8; trailing partial block is clipped


def dummy_forward(x: jax.Array, weight: jax.Array, bias: jax.Array) -> jax.Array:
    """Pallas equivalent of _Dummy.forward.

    x:      any array; only x.shape[0] (batch) is used.
    weight: (num_classes, 1)  -- torch nn.Linear(1, num_classes).weight layout
    bias:   (num_classes,)
    returns (batch, num_classes) float32
    """
    batch = x.shape[0]
    num_classes = weight.shape[0]

    # Single fused operand: [W^T ; b]  -> (2, C).  One DMA instead of two
    # (plus we dropped the (B,1) ones tensor entirely).
    wb = jnp.concatenate(
        [weight.astype(jnp.float32).T,
         bias.astype(jnp.float32).reshape(1, num_classes)],
        axis=0,
    )

    tb = _choose_tb(batch)
    grid = (pl.cdiv(batch, tb),)

    return pl.pallas_call(
        _dummy_kernel,
        out_shape=jax.ShapeDtypeStruct((batch, num_classes), jnp.float32),
        grid=grid,
        in_specs=[
            # (2, C) stays resident across the whole grid (same block every step).
            pl.BlockSpec((2, num_classes), lambda i: (0, 0)),
        ],
        out_specs=pl.BlockSpec((tb, num_classes), lambda i: (i, 0)),
        compiler_params=pltpu.CompilerParams(
            dimension_semantics=("parallel",),
        ),
        cost_estimate=pl.CostEstimate(
            flops=num_classes,                 # one C-wide add
            transcendentals=0,
            bytes_accessed=batch * num_classes * 4 + 2 * num_classes * 4,
        ),
    )(wb)


if __name__ == "__main__":
    # Small shapes consistent with the module: image-like input (batch, C, H, W),
    # though only the batch dimension matters for the forward pass.
    batch, in_channels, spatial = 2, 4, 16
    num_classes = 10
    dropout_rate = 0.5  # unused at inference (eval-mode identity)

    key = jax.random.PRNGKey(0)
    kx, kw, kb = jax.random.split(key, 3)

    x = jax.random.normal(kx, (batch, in_channels, spatial, spatial), dtype=jnp.float32)
    # nn.Linear(1, num_classes): weight (num_classes, 1), bias (num_classes,)
    weight = jax.random.uniform(kw, (num_classes, 1), minval=-1.0, maxval=1.0, dtype=jnp.float32)
    bias = jax.random.uniform(kb, (num_classes,), minval=-1.0, maxval=1.0, dtype=jnp.float32)

    out = dummy_forward(x, weight, bias)
    out = jax.block_until_ready(out)

    # Reference: ones(B,1) @ W^T + b
    ref = jnp.ones((batch, 1), jnp.float32) @ weight.T + bias
    assert out.shape == (batch, num_classes)
    assert jnp.allclose(out, ref, atol=1e-6), "mismatch vs reference"

    print("KERNEL_OK")
</pallas_src>

<mosaic_0001>
module attributes {stable_mosaic.version = 11 : i64} {
  func.func @_dummy_kernel(%arg0: i32, %arg1: memref<2x10xf32, #tpu.memory_space<vmem>>, %arg2: memref<2x10xf32, #tpu.memory_space<vmem>>) attributes {dimension_semantics = [#tpu.dimension_semantics<parallel>], iteration_bounds = array<i64: 1>, scalar_prefetch = 0 : i64, scratch_operands = 0 : i64, tpu.core_type = #tpu.core_type<tc>, window_params = [{pipeline_mode = #tpu.pipeline_mode<synchronous>, transform_indices = @transform_0, window_bounds = array<i64: 2, 10>}, {transform_indices = @transform_1, window_bounds = array<i64: 2, 10>}]} {
    %c0 = arith.constant 0 : index
    %c0_0 = arith.constant 0 : index
    %0 = vector.load %arg1[%c0, %c0_0] : memref<2x10xf32, #tpu.memory_space<vmem>>, vector<1x10xf32>
    %c1 = arith.constant 1 : index
    %c0_1 = arith.constant 0 : index
    %1 = vector.load %arg1[%c1, %c0_1] : memref<2x10xf32, #tpu.memory_space<vmem>>, vector<1x10xf32>
    %2 = arith.addf %0, %1 : vector<1x10xf32>
    %3 = vector.shape_cast %2 : vector<1x10xf32> to vector<1x10xf32>
    %4 = vector.broadcast %3 : vector<1x10xf32> to vector<2x10xf32>
    %c0_2 = arith.constant 0 : index
    %c0_3 = arith.constant 0 : index
    %5 = vector.load %arg2[%c0_2, %c0_3] : memref<2x10xf32, #tpu.memory_space<vmem>>, vector<2x10xf32>
    tpu.vector_store %arg2[%c0_2, %c0_3], %4 {strides = array<i32>} : memref<2x10xf32, #tpu.memory_space<vmem>>, vector<2x10xf32>,
    return
  }
  func.func @transform_0(%arg0: i32) -> (i32, i32) {
    %c0_i32 = arith.constant 0 : i32
    %c0_i32_0 = arith.constant 0 : i32
    %c0_i32_1 = arith.constant 0 : i32
    return %c0_i32, %c0_i32_0 : i32, i32
  }
  func.func @transform_1(%arg0: i32) -> (i32, i32) {
    %c0_i32 = arith.constant 0 : i32
    %c0_i32_0 = arith.constant 0 : i32
    return %arg0, %c0_i32 : i32, i32
  }
}

</mosaic_0001>

<llo_original>
// kernel: tpu_custom_call.1
$region0: #{tpu_custom_call.1}
  #allocation0 [shape = 'u32[]', space=smem, size = 0x4, offset = 0x4, fixed_abs, tag = 'smem constant byte address 0x4 - core index']
  #allocation1 [shape = 'u32[72,128]{1,0:T(1,128)}', space=vmem, size = 0x9000, scoped, tag = 'internal scratch']
  %s0 = inlined_call_operand.hbm [shape: f32[2,10], index: 0, kind: input, shape index: {}]
  %s1 = inlined_call_operand.hbm [shape: f32[2,10], index: 1, kind: output, shape index: {}]
  %s2 = sld [smem:[#allocation0]]
  $region18: #{tpu_custom_call.1} parent=0
    _
  %s4 = ssub.s32 1, %s2
  %s5 = scalar_select 0, %s4, %s2
  $region1: #{tpu_custom_call.1} parent=0
    #allocation2 [shape = 'u8[1024]{0}', space=vmem, size = 0x400, scoped, tag = 'input window, operand 0, single buffered']
    #allocation3 [shape = 's32[1]{0}', space=sflag, size = 0x4, scoped, tag = 'scoped memory for tpu_custom_call.1']
    #allocation4 [shape = 's32[1]{0}', space=sflag, size = 0x4, scoped, tag = 'scoped memory for tpu_custom_call.1']
    #allocation5 [shape = 'u8[1024]{0}', space=vmem, size = 0x400, scoped, tag = 'output window, operand 0, single buffered']
    %6 = vsyncpa [#allocation3], 0
    %7 = vsyncpa [#allocation4], 0
    // Predicated region
    $region2: #{tpu_custom_call.1} parent=1 // pred_check
      _
    $region3: #{tpu_custom_call.1} parent=1 // pred_check_branch
      %9 = sbr.rel (0) target = $region5
    $region4: #{tpu_custom_call.1} parent=1 // pred_region
      %11 = vsyncadd [#allocation3], 0
      %s13 = sshll.u32 %s0, 4
      %s14 = int_to_ptr.hbm [resolvable:$true] %s13
      %s15 = sshll.u32 [#allocation2], 4
      %s16 = int_to_ptr.vmem [resolvable:$true] %s15
      %18 = dma.hbm_to_vmem [thread:$0]  %s14, 32, %s16, [#allocation3]
    $region5: #{tpu_custom_call.1} parent=1 // pred_fallthru
      _
    // Predicated region
    $region6: #{tpu_custom_call.1} parent=1 // pred_check
      _
    $region7: #{tpu_custom_call.1} parent=1 // pred_check_branch
      %20 = sbr.rel (0) target = $region9
    $region8: #{tpu_custom_call.1} parent=1 // pred_region
      %22 = dma.done [#allocation3], 32
    $region9: #{tpu_custom_call.1} parent=1 // pred_fallthru
      _
    %v23 = vld [vmem:[#allocation2] sm:$0x1]
    %v24 = vld [vmem:[#allocation2 + $0x1] sm:$0x1]
    %v25 = vadd.f32 %v23, %v24
    %v26 = vperm.slane %v25, 0
    %vm27 = vcmask 74752
    %28 = vst.msk [vmem:[#allocation5] sm:$0x3] %vm27, %v26
    // Predicated region
    $region10: #{tpu_custom_call.1} parent=1 // pred_check
      _
    $region11: #{tpu_custom_call.1} parent=1 // pred_check_branch
      %30 = sbr.rel (0) target = $region13
    $region12: #{tpu_custom_call.1} parent=1 // pred_region
      %32 = vsyncadd [#allocation4], 0
      %s34 = sshll.u32 [#allocation5], 4
      %s35 = int_to_ptr.vmem [resolvable:$true] %s34
      %s36 = sshll.u32 %s1, 4
      %s37 = int_to_ptr.hbm [resolvable:$true] %s36
      %39 = dma.vmem_to_hbm [thread:$0]  %s35, 32, %s37, [#allocation4]
    $region13: #{tpu_custom_call.1} parent=1 // pred_fallthru
      _
    // Predicated region
    $region14: #{tpu_custom_call.1} parent=1 // pred_check
      _
    $region15: #{tpu_custom_call.1} parent=1 // pred_check_branch
      %41 = sbr.rel (0) target = $region17
    $region16: #{tpu_custom_call.1} parent=1 // pred_region
      %43 = dma.done [#allocation4], 32
    $region17: #{tpu_custom_call.1} parent=1 // pred_fallthru
      _
    %44 = vsyncpa [#allocation3], 1
    %45 = vsyncpa [#allocation4], 1

</llo_original>
